<compile_context>
chip_gen: v7x
topology: tpu7x:2x2x1
jax: 0.10.0
libtpu: 0.0.40
codegen_flags: <defaults>
</compile_context>

<pallas_src>
import functools
import math

import jax
import jax.numpy as jnp
from jax import lax
from jax.experimental import pallas as pl
from jax.experimental.pallas import tpu as pltpu


def _round_up(x, m):
    return (x + m - 1) // m * m


_GELU_C = math.sqrt(2.0 / math.pi)


def _gelu(x):
    # tanh-approximate GELU (EUP tanh); see TODO above re exact erf-GELU.
    return 0.5 * x * (1.0 + jnp.tanh(_GELU_C * (x + 0.044715 * x * x * x)))


# --------------------------------------------------------------------------
# Pallas kernel 1: fused GEMM
#   y = act((LN?(A) @ B) * scale + shift) (+ residual)
#   A, B are bf16; accumulation and epilogue in f32; K is a single block.
# --------------------------------------------------------------------------
def _gemm_kernel(act, has_ln, has_res, eps, *refs):
    i = 0
    a_ref = refs[i]; i += 1
    if has_ln:
        g_ref, be_ref = refs[i], refs[i + 1]; i += 2
    b_ref, s_ref, t_ref = refs[i], refs[i + 1], refs[i + 2]; i += 3
    r_ref = None
    if has_res:
        r_ref = refs[i]; i += 1
    o_ref = refs[i]

    a = a_ref[...]
    if has_ln:
        af = a.astype(jnp.float32)
        mu = jnp.mean(af, axis=-1, keepdims=True)
        var = jnp.mean(jnp.square(af - mu), axis=-1, keepdims=True)
        af = (af - mu) * lax.rsqrt(var + eps)
        a = (af * g_ref[...] + be_ref[...]).astype(jnp.bfloat16)

    y = jnp.dot(a, b_ref[...], preferred_element_type=jnp.float32)
    y = y * s_ref[...] + t_ref[...]
    if act == "relu":
        y = jnp.maximum(y, 0.0)
    elif act == "gelu":
        y = _gelu(y)
    if has_res:
        y = y + r_ref[...].astype(jnp.float32)
    o_ref[...] = y.astype(o_ref.dtype)


def gemm_fused(a, b, *, scale=None, shift=None, act="none", residual=None,
               ln_gamma=None, ln_beta=None, ln_eps=1e-6, tm=256, tn=256):
    """act((LN?(a) @ b) * scale + shift) (+ residual); bf16 in, bf16 out."""
    M, K = a.shape
    K2, N = b.shape
    assert K == K2
    a = a.astype(jnp.bfloat16)
    b = b.astype(jnp.bfloat16)

    tm_eff = min(tm, _round_up(M, 8))
    Mp = _round_up(M, tm_eff)
    tn_eff = N if N <= tn else tn
    Np = _round_up(N, tn_eff)

    if Mp != M:
        a = jnp.pad(a, ((0, Mp - M), (0, 0)))
    if Np != N:
        b = jnp.pad(b, ((0, 0), (0, Np - N)))

    scale = jnp.ones((N,), jnp.float32) if scale is None else scale.astype(jnp.float32)
    shift = jnp.zeros((N,), jnp.float32) if shift is None else shift.astype(jnp.float32)
    s_p = jnp.pad(scale, (0, Np - N)).reshape(1, Np)
    t_p = jnp.pad(shift, (0, Np - N)).reshape(1, Np)

    has_ln = ln_gamma is not None
    has_res = residual is not None

    inputs = [a]
    in_specs = [pl.BlockSpec((tm_eff, K), lambda i, j: (i, 0))]
    if has_ln:
        inputs += [ln_gamma.reshape(1, K).astype(jnp.float32),
                   ln_beta.reshape(1, K).astype(jnp.float32)]
        in_specs += [pl.BlockSpec((1, K), lambda i, j: (0, 0)),
                     pl.BlockSpec((1, K), lambda i, j: (0, 0))]
    inputs += [b, s_p, t_p]
    in_specs += [pl.BlockSpec((K, tn_eff), lambda i, j: (0, j)),
                 pl.BlockSpec((1, tn_eff), lambda i, j: (0, j)),
                 pl.BlockSpec((1, tn_eff), lambda i, j: (0, j))]
    if has_res:
        r = residual.astype(jnp.bfloat16)
        if Mp != M or Np != N:
            r = jnp.pad(r, ((0, Mp - M), (0, Np - N)))
        inputs.append(r)
        in_specs.append(pl.BlockSpec((tm_eff, tn_eff), lambda i, j: (i, j)))

    grid = (Mp // tm_eff, Np // tn_eff)
    out = pl.pallas_call(
        functools.partial(_gemm_kernel, act, has_ln, has_res, ln_eps),
        out_shape=jax.ShapeDtypeStruct((Mp, Np), jnp.bfloat16),
        grid_spec=pltpu.PrefetchScalarGridSpec(
            num_scalar_prefetch=0, grid=grid,
            in_specs=in_specs,
            out_specs=pl.BlockSpec((tm_eff, tn_eff), lambda i, j: (i, j))),
        compiler_params=pltpu.CompilerParams(
            dimension_semantics=("parallel", "parallel")),
    )(*inputs)
    if Mp != M or Np != N:
        out = out[:M, :N]
    return out


# --------------------------------------------------------------------------
# Pallas kernel 2: 3x3 / stride-1 / pad-1 conv on NHWC via 9 shifted GEMMs
# (no im2col materialization; tap is the innermost reduction grid axis)
# --------------------------------------------------------------------------
def _conv3x3_kernel(Lo, Wp, act, x_ref, w_ref, s_ref, t_ref, o_ref, acc_ref):
    tap = pl.program_id(2)

    @pl.when(tap == 0)
    def _():
        acc_ref[...] = jnp.zeros_like(acc_ref)

    dy = tap // 3
    dx = tap - dy * 3
    a = x_ref[pl.ds(dy * Wp + dx, Lo), :]                  # (Lo, Cin) bf16
    acc_ref[...] += jnp.dot(a, w_ref[...], preferred_element_type=jnp.float32)

    @pl.when(tap == 8)
    def _():
        y = acc_ref[...] * s_ref[...] + t_ref[...]
        if act == "relu":
            y = jnp.maximum(y, 0.0)
        elif act == "gelu":
            y = _gelu(y)
        o_ref[...] = y.astype(o_ref.dtype)


def conv3x3(x, w, *, scale=None, shift=None, act="none", tn=256):
    """x: NHWC, w: (Cout, Cin, 3, 3).  y = act(conv(x, w)*scale + shift)."""
    N, H, W, Cin = x.shape
    Cout = w.shape[0]
    Wp = W + 2
    Lo = H * Wp                       # over-computed rows; garbage cols sliced off
    Lp = (H + 3) * Wp                 # one extra padded row keeps every tap in-bounds
    xpad = jnp.pad(x.astype(jnp.bfloat16),
                   ((0, 0), (1, 2), (1, 1), (0, 0))).reshape(N, Lp, Cin)
    w9 = jnp.transpose(w, (2, 3, 1, 0)).reshape(9, Cin, Cout).astype(jnp.bfloat16)

    if scale is None:
        scale = jnp.ones((Cout,), jnp.float32)
    if shift is None:
        shift = jnp.zeros((Cout,), jnp.float32)

    tn_eff = Cout if Cout <= tn else tn
    Cp = _round_up(Cout, tn_eff)
    if Cp != Cout:
        w9 = jnp.pad(w9, ((0, 0), (0, 0), (0, Cp - Cout)))
    s_p = jnp.pad(scale.astype(jnp.float32), (0, Cp - Cout)).reshape(1, Cp)
    t_p = jnp.pad(shift.astype(jnp.float32), (0, Cp - Cout)).reshape(1, Cp)

    grid = (N, Cp // tn_eff, 9)
    out = pl.pallas_call(
        functools.partial(_conv3x3_kernel, Lo, Wp, act),
        out_shape=jax.ShapeDtypeStruct((N, Lo, Cp), jnp.bfloat16),
        grid_spec=pltpu.PrefetchScalarGridSpec(
            num_scalar_prefetch=0, grid=grid,
            in_specs=[
                pl.BlockSpec((None, Lp, Cin), lambda n, j, t: (n, 0, 0)),
                pl.BlockSpec((None, Cin, tn_eff), lambda n, j, t: (t, 0, j)),
                pl.BlockSpec((1, tn_eff), lambda n, j, t: (0, j)),
                pl.BlockSpec((1, tn_eff), lambda n, j, t: (0, j)),
            ],
            out_specs=pl.BlockSpec((None, Lo, tn_eff), lambda n, j, t: (n, 0, j)),
            scratch_shapes=[pltpu.VMEM((Lo, tn_eff), jnp.float32)]),
        compiler_params=pltpu.CompilerParams(
            dimension_semantics=("parallel", "parallel", "arbitrary")),
    )(xpad, w9, s_p, t_p)
    out = out[:, :, :Cout].reshape(N, H, Wp, Cout)[:, :, :W, :]
    return out


# --------------------------------------------------------------------------
# Pallas kernel 3: row-wise LayerNorm over the last (channel) dim
# --------------------------------------------------------------------------
def _ln_kernel(eps, x_ref, g_ref, b_ref, o_ref):
    x = x_ref[...].astype(jnp.float32)
    mu = jnp.mean(x, axis=-1, keepdims=True)
    var = jnp.mean(jnp.square(x - mu), axis=-1, keepdims=True)
    y = (x - mu) * lax.rsqrt(var + eps)
    o_ref[...] = (y * g_ref[...] + b_ref[...]).astype(o_ref.dtype)


def layernorm_rows(x, gamma, beta, eps=1e-6, tm=256):
    M, C = x.shape
    tm_eff = min(tm, _round_up(M, 8))
    Mp = _round_up(M, tm_eff)
    xp = x.astype(jnp.bfloat16)
    if Mp != M:
        xp = jnp.pad(xp, ((0, Mp - M), (0, 0)))
    out = pl.pallas_call(
        functools.partial(_ln_kernel, eps),
        out_shape=jax.ShapeDtypeStruct((Mp, C), jnp.bfloat16),
        grid_spec=pltpu.PrefetchScalarGridSpec(
            num_scalar_prefetch=0, grid=(Mp // tm_eff,),
            in_specs=[pl.BlockSpec((tm_eff, C), lambda i: (i, 0)),
                      pl.BlockSpec((1, C), lambda i: (0, 0)),
                      pl.BlockSpec((1, C), lambda i: (0, 0))],
            out_specs=pl.BlockSpec((tm_eff, C), lambda i: (i, 0))),
        compiler_params=pltpu.CompilerParams(dimension_semantics=("parallel",)),
    )(xp,
      gamma.reshape(1, C).astype(jnp.float32),
      beta.reshape(1, C).astype(jnp.float32))
    return out[:M] if Mp != M else out


def layernorm_nhwc(x, gamma, beta, eps=1e-6):
    N, H, W, C = x.shape
    y = layernorm_rows(x.reshape(N * H * W, C), gamma, beta, eps)
    return y.reshape(N, H, W, C)


# --------------------------------------------------------------------------
# Pallas kernel 4: depthwise 7x7 conv (ConvNeXt), flattened shift-MAC, NHWC
# --------------------------------------------------------------------------
def _dwconv7_kernel(Lo, Wp, x_ref, w_ref, b_ref, o_ref, acc_ref):
    acc_ref[...] = jnp.zeros_like(acc_ref)
    for kh in range(7):
        for kw in range(7):
            off = kh * Wp + kw
            tap = kh * 7 + kw
            xw = x_ref[off:off + Lo, :].astype(jnp.float32)       # static slice
            acc_ref[...] += xw * w_ref[tap:tap + 1, :]            # (Lo,C)*(1,C)
    o_ref[...] = (acc_ref[...] + b_ref[...]).astype(o_ref.dtype)


def depthwise_conv7x7(x, w, b):
    """x: NHWC, w: (C, 1, 7, 7), b: (C,)."""
    N, H, W, C = x.shape
    Wp = W + 6
    Lo = H * Wp
    Lp = (H + 7) * Wp
    xpad = jnp.pad(x.astype(jnp.bfloat16),
                   ((0, 0), (3, 4), (3, 3), (0, 0))).reshape(N, Lp, C)
    w49 = jnp.transpose(w.reshape(C, 49), (1, 0)).astype(jnp.float32)   # (49, C)
    out = pl.pallas_call(
        functools.partial(_dwconv7_kernel, Lo, Wp),
        out_shape=jax.ShapeDtypeStruct((N, Lo, C), jnp.bfloat16),
        grid_spec=pltpu.PrefetchScalarGridSpec(
            num_scalar_prefetch=0, grid=(N,),
            in_specs=[pl.BlockSpec((None, Lp, C), lambda n: (n, 0, 0)),
                      pl.BlockSpec((49, C), lambda n: (0, 0)),
                      pl.BlockSpec((1, C), lambda n: (0, 0))],
            out_specs=pl.BlockSpec((None, Lo, C), lambda n: (n, 0, 0)),
            scratch_shapes=[pltpu.VMEM((Lo, C), jnp.float32)]),
        compiler_params=pltpu.CompilerParams(dimension_semantics=("parallel",)),
    )(xpad, w49, b.reshape(1, C).astype(jnp.float32))
    return out.reshape(N, H, Wp, C)[:, :, :W, :]


# --------------------------------------------------------------------------
# Convolution / resampling wrappers (NHWC, glue is reshapes only)
# --------------------------------------------------------------------------
def conv1x1(x, w, bias):
    """x NHWC, w (Cout, Cin, 1, 1)."""
    N, H, W, C = x.shape
    Cout = w.shape[0]
    y = gemm_fused(x.reshape(N * H * W, C), w.reshape(Cout, C).T, shift=bias)
    return y.reshape(N, H, W, Cout)


def conv2x2_s2(x, w, bias):
    """2x2 stride-2 conv (non-overlapping) via space-to-depth + GEMM."""
    N, H, W, C = x.shape
    Cout = w.shape[0]
    p = x.reshape(N, H // 2, 2, W // 2, 2, C)
    p = jnp.transpose(p, (0, 1, 3, 2, 4, 5)).reshape(N * (H // 2) * (W // 2), 4 * C)
    wm = jnp.transpose(w, (2, 3, 1, 0)).reshape(4 * C, Cout)
    y = gemm_fused(p, wm, shift=bias)
    return y.reshape(N, H // 2, W // 2, Cout)


def conv_transpose2x2(x, w, bias):
    """nn.ConvTranspose2d(Cin, Cout, 2, stride=2); x NHWC, w (Cin, Cout, 2, 2)."""
    N, H, W, C = x.shape
    Cin, Cout = w.shape[0], w.shape[1]
    a = x.reshape(N * H * W, C)
    w2d = w.reshape(Cin, Cout * 4)
    shift = jnp.repeat(bias, 4)
    y = gemm_fused(a, w2d, shift=shift)
    y = y.reshape(N, H, W, Cout, 2, 2)
    y = jnp.transpose(y, (0, 1, 4, 2, 5, 3)).reshape(N, 2 * H, 2 * W, Cout)
    return y


def upsample2x_bilinear_align(x):
    """nn.Upsample(scale_factor=2, mode='bilinear', align_corners=True), NHWC."""
    N, H, W, C = x.shape
    Ho, Wo = 2 * H, 2 * W

    def coords(n_in, n_out):
        pos = jnp.arange(n_out, dtype=jnp.float32) * (n_in - 1) / (n_out - 1)
        i0 = jnp.floor(pos).astype(jnp.int32)
        i1 = jnp.minimum(i0 + 1, n_in - 1)
        return i0, i1, pos - i0.astype(jnp.float32)

    y0, y1, wy = coords(H, Ho)
    x0, x1, wx = coords(W, Wo)
    r0 = jnp.take(x, y0, axis=1).astype(jnp.float32)
    r1 = jnp.take(x, y1, axis=1).astype(jnp.float32)

    wxb = wx[None, None, :, None]

    def lerp_w(r):
        c0 = jnp.take(r, x0, axis=2)
        c1 = jnp.take(r, x1, axis=2)
        return c0 * (1.0 - wxb) + c1 * wxb

    t0, t1 = lerp_w(r0), lerp_w(r1)
    wyb = wy[None, :, None, None]
    return (t0 * (1.0 - wyb) + t1 * wyb).astype(jnp.bfloat16)


def maxpool2x2(x):
    N, H, W, C = x.shape
    return x.reshape(N, H // 2, 2, W // 2, 2, C).max(axis=(2, 4))


def bn_fold(bn, conv_bias=None, eps=1e-5):
    """Fold inference-mode BatchNorm (+ optional conv bias) into scale/shift."""
    s = bn["gamma"] / jnp.sqrt(bn["var"] + eps)
    b = jnp.zeros_like(bn["mean"]) if conv_bias is None else conv_bias
    return s, (b - bn["mean"]) * s + bn["beta"]


# --------------------------------------------------------------------------
# Parameter construction (deterministic, synthetic)
# --------------------------------------------------------------------------
class ParamGen:
    def __init__(self, key):
        self.key = key
        self.i = 0

    def normal(self, shape):
        self.i += 1
        fan_in = max(1, math.prod(shape[1:])) if len(shape) > 1 else 1
        return (1.0 / math.sqrt(fan_in)) * jax.random.normal(
            jax.random.fold_in(self.key, self.i), shape, jnp.float32)

    def zeros(self, shape):
        return jnp.zeros(shape, jnp.float32)

    def ones(self, shape):
        return jnp.ones(shape, jnp.float32)


def make_conv(pg, cin, cout, k, bias=True):
    return {"w": pg.normal((cout, cin, k, k)),
            "b": pg.zeros((cout,)) if bias else None}


def make_bn(pg, c):
    return {"gamma": pg.ones((c,)), "beta": pg.zeros((c,)),
            "mean": pg.zeros((c,)), "var": pg.ones((c,))}


def make_ln(pg, c):
    return {"gamma": pg.ones((c,)), "beta": pg.zeros((c,))}


def make_double_conv(pg, cin, cout):
    return {"c1": make_conv(pg, cin, cout, 3, bias=False), "bn1": make_bn(pg, cout),
            "c2": make_conv(pg, cout, cout, 3, bias=False), "bn2": make_bn(pg, cout)}


def make_up(pg, cin, cout):
    return {"upw": pg.normal((cin, cin // 2, 2, 2)), "upb": pg.zeros((cin // 2,)),
            "conv": make_double_conv(pg, cin, cout)}


def make_convnext_block(pg, dim):
    return {"dw_w": pg.normal((dim, 1, 7, 7)), "dw_b": pg.zeros((dim,)),
            "ln": make_ln(pg, dim),
            "fc1_w": pg.normal((4 * dim, dim)), "fc1_b": pg.zeros((4 * dim,)),
            "fc2_w": pg.normal((dim, 4 * dim)), "fc2_b": pg.zeros((dim,)),
            "gamma": 1e-6 * pg.ones((dim,))}    # layer-scale init as in ConvNeXt


def build_params(key, n_channels, n_classes,
                 depths=(2, 2, 2, 2), dims=(128, 256, 512, 1024)):
    pg = ParamGen(key)
    bb = {"downsample": [], "stages": [], "out_norms": []}
    for i in range(4):
        cin = n_channels if i == 0 else dims[i - 1]
        bb["downsample"].append(
            {"conv": make_conv(pg, cin, dims[i], 2, bias=True),
             "ln": make_ln(pg, dims[i] if i == 0 else dims[i - 1])})
        bb["stages"].append([make_convnext_block(pg, dims[i])
                             for _ in range(depths[i])])
        bb["out_norms"].append(make_ln(pg, dims[i]))

    params = {
        "backbone": bb,
        "conv": make_double_conv(pg, n_channels, 32),
        "down1_1": make_double_conv(pg, 32, 64),
        "down1_2": make_double_conv(pg, 64, 128),
        "down1_3": make_double_conv(pg, 128, 256),
        "down1_4": make_double_conv(pg, 256, 512),
        "up1_1": make_up(pg, 512, 256),
        "up1_2": make_up(pg, 256, 128),
        "up1_3": make_up(pg, 128, 64),
        "up1_4": make_up(pg, 64, 32),
        "up4": {"conv": make_conv(pg, 1024, 512, 3, bias=True), "bn": make_bn(pg, 512)},
        "up4_": make_conv(pg, 1024, 512, 1, bias=True),
        "up3": {"conv": make_conv(pg, 512, 256, 3, bias=True), "bn": make_bn(pg, 256)},
        "up3_": make_conv(pg, 512, 256, 1, bias=True),
        "up2": {"conv": make_conv(pg, 256, 128, 3, bias=True), "bn": make_bn(pg, 128)},
        "up2_": make_conv(pg, 256, 128, 1, bias=True),
        "up1": {"conv": make_conv(pg, 128, 64, 3, bias=True), "bn": make_bn(pg, 64)},
        "cls_seg": make_conv(pg, 64, n_classes, 1, bias=True),
        "out": make_conv(pg, 32, n_classes, 1, bias=True),
    }
    return params


# --------------------------------------------------------------------------
# Forward passes (all activations NHWC bf16)
# --------------------------------------------------------------------------
def convnext_block_fwd(p, x):
    N, H, W, C = x.shape
    h = depthwise_conv7x7(x, p["dw_w"], p["dw_b"])
    h2 = h.reshape(N * H * W, C)
    xr = x.reshape(N * H * W, C)
    # fused LayerNorm + fc1 + GELU (single-K GEMM)
    a1 = gemm_fused(h2, p["fc1_w"].T, shift=p["fc1_b"], act="gelu",
                    ln_gamma=p["ln"]["gamma"], ln_beta=p["ln"]["beta"])
    # fc2 + layer-scale + residual add, all in the GEMM epilogue
    y = gemm_fused(a1, p["fc2_w"].T, scale=p["gamma"],
                   shift=p["fc2_b"] * p["gamma"], residual=xr)
    return y.reshape(N, H, W, C)                # drop_path = identity (eval)


def backbone_fwd(p, x):
    feats = []
    h = x
    for i in range(4):
        ds = p["downsample"][i]
        if i == 0:
            h = conv2x2_s2(h, ds["conv"]["w"], ds["conv"]["b"])
            h = layernorm_nhwc(h, ds["ln"]["gamma"], ds["ln"]["beta"])
        else:
            h = layernorm_nhwc(h, ds["ln"]["gamma"], ds["ln"]["beta"])
            h = conv2x2_s2(h, ds["conv"]["w"], ds["conv"]["b"])
        for blk in p["stages"][i]:
            h = convnext_block_fwd(blk, h)
        n = p["out_norms"][i]
        feats.append(layernorm_nhwc(h, n["gamma"], n["beta"]))
    return feats


def double_conv_fwd(p, x):
    s1, t1 = bn_fold(p["bn1"])
    x = conv3x3(x, p["c1"]["w"], scale=s1, shift=t1, act="relu")
    s2, t2 = bn_fold(p["bn2"])
    x = conv3x3(x, p["c2"]["w"], scale=s2, shift=t2, act="relu")
    return x


def down_fwd(p, x):
    return double_conv_fwd(p, maxpool2x2(x))


def up_fwd(p, x1, x2):
    x1 = conv_transpose2x2(x1, p["upw"], p["upb"])
    # spatial sizes already match (power-of-two input), so the UNet F.pad is a no-op
    x = jnp.concatenate([x2, x1], axis=-1)
    return double_conv_fwd(p["conv"], x)


def dec_up_fwd(p, x):
    x = upsample2x_bilinear_align(x)
    s, t = bn_fold(p["bn"], conv_bias=p["conv"]["b"])
    return conv3x3(x, p["conv"]["w"], scale=s, shift=t, act="gelu")


def bcu_net_fwd(params, x):
    # one layout change at the entrance: NCHW f32 -> NHWC bf16
    xh = jnp.transpose(x, (0, 2, 3, 1)).astype(jnp.bfloat16)

    stage1, stage2, stage3, stage4 = backbone_fwd(params["backbone"], xh)

    up4 = dec_up_fwd(params["up4"], stage4)
    up4 = jnp.concatenate([up4, stage3], axis=-1)
    up4 = conv1x1(up4, params["up4_"]["w"], params["up4_"]["b"])

    up3 = dec_up_fwd(params["up3"], up4)
    up3 = jnp.concatenate([up3, stage2], axis=-1)
    up3 = conv1x1(up3, params["up3_"]["w"], params["up3_"]["b"])

    up2 = dec_up_fwd(params["up2"], up3)
    up2 = jnp.concatenate([up2, stage1], axis=-1)
    up2 = conv1x1(up2, params["up2_"]["w"], params["up2_"]["b"])

    out_feat = dec_up_fwd(params["up1"], up2)
    out2 = conv1x1(out_feat, params["cls_seg"]["w"], params["cls_seg"]["b"])

    x1_1 = double_conv_fwd(params["conv"], xh)
    x1_2 = down_fwd(params["down1_1"], x1_1)
    x1_3 = down_fwd(params["down1_2"], x1_2)
    x1_4 = down_fwd(params["down1_3"], x1_3)
    x1_5 = down_fwd(params["down1_4"], x1_4)
    x1_6 = up_fwd(params["up1_1"], x1_5, x1_4)
    x1_7 = up_fwd(params["up1_2"], x1_6, x1_3)
    x1_8 = up_fwd(params["up1_3"], x1_7, x1_2)
    x1_9 = up_fwd(params["up1_4"], x1_8, x1_1)
    out1 = conv1x1(x1_9, params["out"]["w"], params["out"]["b"])

    # one layout change at the exit: NHWC bf16 -> NCHW f32
    out1 = jnp.transpose(out1.astype(jnp.float32), (0, 3, 1, 2))
    out2 = jnp.transpose(out2.astype(jnp.float32), (0, 3, 1, 2))
    out = out1 * 0.4 + out2 * 0.6        # trivial blend, kept in XLA (perf review)
    return out1, out2, out


if __name__ == "__main__":
    key = jax.random.PRNGKey(0)
    n_channels, n_classes = 3, 2
    params = build_params(jax.random.fold_in(key, 1), n_channels, n_classes)
    x = jax.random.normal(jax.random.fold_in(key, 2),
                          (2, n_channels, 32, 32), jnp.float32)

    out1, out2, out = bcu_net_fwd(params, x)
    jax.block_until_ready((out1, out2, out))

    assert out1.shape == (2, n_classes, 32, 32), out1.shape
    assert out2.shape == (2, n_classes, 32, 32), out2.shape
    assert out.shape == (2, n_classes, 32, 32), out.shape
    assert jnp.all(jnp.isfinite(out))
    print("KERNEL_OK")
</pallas_src>

<mosaic_0001>
module attributes {stable_mosaic.version = 11 : i64} {
  func.func @_gemm_kernel(%arg0: i32, %arg1: i32, %arg2: memref<256x12xbf16, #tpu.memory_space<vmem>>, %arg3: memref<12x128xbf16, #tpu.memory_space<vmem>>, %arg4: memref<1x128xf32, #tpu.memory_space<vmem>>, %arg5: memref<1x128xf32, #tpu.memory_space<vmem>>, %arg6: memref<256x128xbf16, #tpu.memory_space<vmem>>) attributes {dimension_semantics = [#tpu.dimension_semantics<parallel>, #tpu.dimension_semantics<parallel>], iteration_bounds = array<i64: 2, 1>, scalar_prefetch = 0 : i64, scratch_operands = 0 : i64, tpu.core_type = #tpu.core_type<tc>, window_params = [{transform_indices = @transform_0, window_bounds = array<i64: 256, 12>}, {transform_indices = @transform_1, window_bounds = array<i64: 12, 128>}, {transform_indices = @transform_2, window_bounds = array<i64: 1, 128>}, {transform_indices = @transform_3, window_bounds = array<i64: 1, 128>}, {transform_indices = @transform_4, window_bounds = array<i64: 256, 128>}]} {
    %c0 = arith.constant 0 : index
    %c0_0 = arith.constant 0 : index
    %0 = vector.load %arg2[%c0, %c0_0] : memref<256x12xbf16, #tpu.memory_space<vmem>>, vector<256x12xbf16>
    %c0_1 = arith.constant 0 : index
    %c0_2 = arith.constant 0 : index
    %1 = vector.load %arg3[%c0_1, %c0_2] : memref<12x128xbf16, #tpu.memory_space<vmem>>, vector<12x128xbf16>
    %cst = arith.constant dense<0.000000e+00> : vector<256x128xf32>
    %2 = tpu.matmul %0, %1, %cst {dimension_numbers = #tpu.dot_dimension_numbers<[1], [0], [0], [1], [0, 0, 1, 1], [], []>} : vector<256x12xbf16>, vector<12x128xbf16>, vector<256x128xf32> -> vector<256x128xf32>
    %c0_3 = arith.constant 0 : index
    %c0_4 = arith.constant 0 : index
    %3 = vector.load %arg4[%c0_3, %c0_4] : memref<1x128xf32, #tpu.memory_space<vmem>>, vector<1x128xf32>
    %4 = vector.broadcast %3 : vector<1x128xf32> to vector<256x128xf32>
    %5 = arith.mulf %2, %4 : vector<256x128xf32>
    %c0_5 = arith.constant 0 : index
    %c0_6 = arith.constant 0 : index
    %6 = vector.load %arg5[%c0_5, %c0_6] : memref<1x128xf32, #tpu.memory_space<vmem>>, vector<1x128xf32>
    %7 = vector.broadcast %6 : vector<1x128xf32> to vector<256x128xf32>
    %8 = arith.addf %5, %7 : vector<256x128xf32>
    %9 = arith.truncf %8 : vector<256x128xf32> to vector<256x128xbf16>
    %c0_7 = arith.constant 0 : index
    %c0_8 = arith.constant 0 : index
    %10 = vector.load %arg6[%c0_7, %c0_8] : memref<256x128xbf16, #tpu.memory_space<vmem>>, vector<256x128xbf16>
    tpu.vector_store %arg6[%c0_7, %c0_8], %9 {strides = array<i32>} : memref<256x128xbf16, #tpu.memory_space<vmem>>, vector<256x128xbf16>,
    return
  }
  func.func @transform_0(%arg0: i32, %arg1: i32) -> (i32, i32) {
    %c0_i32 = arith.constant 0 : i32
    %c0_i32_0 = arith.constant 0 : i32
    return %arg0, %c0_i32 : i32, i32
  }
  func.func @transform_1(%arg0: i32, %arg1: i32) -> (i32, i32) {
    %c0_i32 = arith.constant 0 : i32
    %c0_i32_0 = arith.constant 0 : i32
    return %c0_i32, %arg1 : i32, i32
  }
  func.func @transform_2(%arg0: i32, %arg1: i32) -> (i32, i32) {
    %c0_i32 = arith.constant 0 : i32
    %c0_i32_0 = arith.constant 0 : i32
    return %c0_i32, %arg1 : i32, i32
  }
  func.func @transform_3(%arg0: i32, %arg1: i32) -> (i32, i32) {
    %c0_i32 = arith.constant 0 : i32
    %c0_i32_0 = arith.constant 0 : i32
    return %c0_i32, %arg1 : i32, i32
  }
  func.func @transform_4(%arg0: i32, %arg1: i32) -> (i32, i32) {
    %c0_i32 = arith.constant 0 : i32
    return %arg0, %arg1 : i32, i32
  }
}

</mosaic_0001>

<llo_original>
// kernel: tpu_custom_call.1
$region0: #{tpu_custom_call.1}
  #allocation0 [shape = 'u32[]', space=smem, size = 0x4, offset = 0x4, fixed_abs, tag = 'smem constant byte address 0x4 - core index']
  #allocation1 [shape = 'u32[144,128]{1,0:T(1,128)}', space=vmem, size = 0x12000, scoped, tag = 'internal scratch']
  %s0 = inlined_call_operand.vmem [shape: bf16[512,12], index: 0, kind: input, shape index: {}]
  %s1 = inlined_call_operand.vmem [shape: bf16[12,128], index: 1, kind: input, shape index: {}]
  %s2 = inlined_call_operand.vmem [shape: f32[1,128], index: 2, kind: input, shape index: {}]
  %s3 = inlined_call_operand.vmem [shape: f32[1,128], index: 3, kind: input, shape index: {}]
  %s4 = inlined_call_operand.hbm [shape: bf16[512,128], index: 4, kind: output, shape index: {}]
  %s5 = sld [smem:[#allocation0]]
  $region49: #{tpu_custom_call.1} parent=0
    _
  %s7 = ssub.s32 1, %s5
  %s8 = scalar_select 0, %s7, %s5
  $region1: #{tpu_custom_call.1} parent=0
    #allocation2 [shape = 'u8[131072]{0}', space=vmem, size = 0x20000, scoped, tag = 'output window, operand 0']
    #allocation3 [shape = 's32[2]{0}', space=sflag, size = 0x8, scoped, tag = 'scoped memory for tpu_custom_call.1']
    %9 = vsyncpa [#allocation3], 0
    %s10 = scalar_lea.sflag [#allocation3], 1
    %11 = vsyncpa %s10, 0
    loop: start=0, step=1, limit=4
    $region2: #{tpu_custom_call.1} parent=1 // loop_pre_header
      _
    $region3: #{tpu_custom_call.1} parent=1 // loop_header
      %s13 = sphi 0, %s17
      %p14 = scmp.ge.s32.totalorder %s13, 4
      %s20 = sphi 0, %s32
      %s21 = sphi 0, %s28
      %s22 = sphi 0, %s20
      %s23 = sphi 0, %s21
      %s24 = sphi 0, %s22
      %s25 = sphi 0, %s23
      %s35 = sphi 0, %s37
      %s38 = sphi 0, %s35
      %s39 = sphi 0, %s38
      %s55 = sphi 0, %s39
      %s61 = sphi 0, %s63
      %s64 = sphi 0, %s61
      %s65 = sphi 0, %s64
      %s81 = sphi 0, %s65
      %s87 = sphi 0, %s89
      %s90 = sphi 0, %s87
      %s91 = sphi 0, %s90
      %s107 = sphi 0, %s91
      %s113 = sphi 0, %s115
      %s116 = sphi 0, %s113
      %s117 = sphi 0, %s116
      %s133 = sphi 0, %s117
      %s141 = sphi 0, %s143
      %s144 = sphi 0, %s141
      %s145 = sphi 0, %s144
      %s161 = sphi 0, %s145
    $region4: #{tpu_custom_call.1} parent=1 // loop_header_branch
      %16 = sbr.rel (%p14) target = $region8
    $region5: #{tpu_custom_call.1} parent=1 // loop_body
      %s18 = ssub.s32 %s13, 1
      %s19 = ssub.s32 %s13, 2
      %s26 = sadd.s32 1, %s21
      %p27 = scmp.ge.s32.totalorder %s26, 1
      %s28 = scalar_select %p27, 0, %s26
      %s29 = sadd.s32 1, %s20
      %s30 = scalar_select %p27, %s29, %s20
      %p31 = scmp.ge.s32.totalorder %s30, 2
      %s32 = scalar_select %p31, 0, %s30
      %s33 = ssub.s32 %s20, %s32
      %p34 = scmp.eq.s32.totalorder %s33, 0
      %s36 = sadd.s32 %s35, 1
      %s37 = scalar_select %p34, %s35, %s36
      %p40 = pneg %p34
      %p41 = scmp.eq.s32.totalorder %s13, 1
      %p42 = por %p40, %p41
      %p43 = scmp.ne.s32.totalorder %s35, %s38
      %p44 = scmp.eq.s32.totalorder %s13, 0
      %p45 = por %p43, %p44
      %p46 = scmp.ne.s32.totalorder %s35, %s38
      %p47 = scmp.eq.s32.totalorder %s18, 1
      %p48 = por %p46, %p47
      %p49 = scmp.ne.s32.totalorder %s38, %s39
      %p50 = scmp.eq.s32.totalorder %s18, 0
      %p51 = por %p49, %p50
      %p52 = scmp.ne.s32.totalorder %s38, %s39
      %p53 = scmp.eq.s32.totalorder %s19, 1
      %p54 = por %p52, %p53
      %p56 = scmp.ne.s32.totalorder %s39, %s55
      %p57 = scmp.eq.s32.totalorder %s19, 0
      %p58 = por %p56, %p57
      %s59 = ssub.s32 %s21, %s28
      %p60 = scmp.eq.s32.totalorder %s59, 0
      %s62 = sadd.s32 %s61, 1
      %s63 = scalar_select %p60, %s61, %s62
      %p66 = pneg %p60
      %p67 = scmp.eq.s32.totalorder %s13, 1
      %p68 = por %p66, %p67
      %p69 = scmp.ne.s32.totalorder %s61, %s64
      %p70 = scmp.eq.s32.totalorder %s13, 0
      %p71 = por %p69, %p70
      %p72 = scmp.ne.s32.totalorder %s61, %s64
      %p73 = scmp.eq.s32.totalorder %s18, 1
      %p74 = por %p72, %p73
      %p75 = scmp.ne.s32.totalorder %s64, %s65
      %p76 = scmp.eq.s32.totalorder %s18, 0
      %p77 = por %p75, %p76
      %p78 = scmp.ne.s32.totalorder %s64, %s65
      %p79 = scmp.eq.s32.totalorder %s19, 1
      %p80 = por %p78, %p79
      %p82 = scmp.ne.s32.totalorder %s65, %s81
      %p83 = scmp.eq.s32.totalorder %s19, 0
      %p84 = por %p82, %p83
      %s85 = ssub.s32 %s21, %s28
      %p86 = scmp.eq.s32.totalorder %s85, 0
      %s88 = sadd.s32 %s87, 1
      %s89 = scalar_select %p86, %s87, %s88
      %p92 = pneg %p86
      %p93 = scmp.eq.s32.totalorder %s13, 1
      %p94 = por %p92, %p93
      %p95 = scmp.ne.s32.totalorder %s87, %s90
      %p96 = scmp.eq.s32.totalorder %s13, 0
      %p97 = por %p95, %p96
      %p98 = scmp.ne.s32.totalorder %s87, %s90
      %p99 = scmp.eq.s32.totalorder %s18, 1
      %p100 = por %p98, %p99
      %p101 = scmp.ne.s32.totalorder %s90, %s91
      %p102 = scmp.eq.s32.totalorder %s18, 0
      %p103 = por %p101, %p102
      %p104 = scmp.ne.s32.totalorder %s90, %s91
      %p105 = scmp.eq.s32.totalorder %s19, 1
      %p106 = por %p104, %p105
      %p108 = scmp.ne.s32.totalorder %s91, %s107
      %p109 = scmp.eq.s32.totalorder %s19, 0
      %p110 = por %p108, %p109
      %s111 = ssub.s32 %s21, %s28
      %p112 = scmp.eq.s32.totalorder %s111, 0
      %s114 = sadd.s32 %s113, 1
      %s115 = scalar_select %p112, %s113, %s114
      %p118 = pneg %p112
      %p119 = scmp.eq.s32.totalorder %s13, 1
      %p120 = por %p118, %p119
      %p121 = scmp.ne.s32.totalorder %s113, %s116
      %p122 = scmp.eq.s32.totalorder %s13, 0
      %p123 = por %p121, %p122
      %p124 = scmp.ne.s32.totalorder %s113, %s116
      %p125 = scmp.eq.s32.totalorder %s18, 1
      %p126 = por %p124, %p125
      %p127 = scmp.ne.s32.totalorder %s116, %s117
      %p128 = scmp.eq.s32.totalorder %s18, 0
      %p129 = por %p127, %p128
      %p130 = scmp.ne.s32.totalorder %s116, %s117
      %p131 = scmp.eq.s32.totalorder %s19, 1
      %p132 = por %p130, %p131
      %p134 = scmp.ne.s32.totalorder %s117, %s133
      %p135 = scmp.eq.s32.totalorder %s19, 0
      %p136 = por %p134, %p135
      %s137 = ssub.s32 %s20, %s32
      %s138 = ssub.s32 %s21, %s28
      %s139 = sor.u32 %s137, %s138
      %p140 = scmp.eq.s32.totalorder %s139, 0
      %s142 = sadd.s32 %s141, 1
      %s143 = scalar_select %p140, %s141, %s142
      %p146 = pneg %p140
      %p147 = scmp.eq.s32.totalorder %s13, 1
      %p148 = por %p146, %p147
      %p149 = scmp.ne.s32.totalorder %s141, %s144
      %p150 = scmp.eq.s32.totalorder %s13, 0
      %p151 = por %p149, %p150
      %p152 = scmp.ne.s32.totalorder %s141, %s144
      %p153 = scmp.eq.s32.totalorder %s18, 1
      %p154 = por %p152, %p153
      %p155 = scmp.ne.s32.totalorder %s144, %s145
      %p156 = scmp.eq.s32.totalorder %s18, 0
      %p157 = por %p155, %p156
      %p158 = scmp.ne.s32.totalorder %s144, %s145
      %p159 = scmp.eq.s32.totalorder %s19, 1
      %p160 = por %p158, %p159
      %p162 = scmp.ne.s32.totalorder %s145, %s161
      %p163 = scmp.eq.s32.totalorder %s19, 0
      %p164 = por %p162, %p163
      %p165 = scmp.le.s32.totalorder 1, %s13
      %p166 = scmp.lt.s32.totalorder %s13, 3
      %p167 = pnand %p165, %p166
      %p168 = pneg %p167
      // Predicated region
      $region9: #{tpu_custom_call.1} parent=5 // pred_check
        _
      $region10: #{tpu_custom_call.1} parent=5 // pred_check_branch
        %170 = sbr.rel (%p167) target = $region12
      $region11: #{tpu_custom_call.1} parent=5 // pred_region
        %s171 = ssub.s32 %s13, 1
        // Predicated region
        $region13: #{tpu_custom_call.1} parent=11 // pred_check
          %p172 = pneg %p77
        $region14: #{tpu_custom_call.1} parent=11 // pred_check_branch
          %174 = sbr.rel (%p172) target = $region16
        $region15: #{tpu_custom_call.1} parent=11 // pred_region
          %p175 = scmp.lt.s32.totalorder %s23, 0
          %s176 = scalar_select %p175, %s23, 0
          %s177 = smul.addr %s176, 4
          %s178 = scalar_lea.vmem %s1, %s177
        $region16: #{tpu_custom_call.1} parent=11 // pred_fallthru
          _
        // Predicated region
        $region17: #{tpu_custom_call.1} parent=11 // pred_check
          %p179 = pneg %p103
        $region18: #{tpu_custom_call.1} parent=11 // pred_check_branch
          %181 = sbr.rel (%p179) target = $region20
        $region19: #{tpu_custom_call.1} parent=11 // pred_region
          %p182 = scmp.lt.s32.totalorder %s23, 0
          %s183 = scalar_select %p182, %s23, 0
          %s184 = scalar_lea.vmem %s2, %s183
        $region20: #{tpu_custom_call.1} parent=11 // pred_fallthru
          _
        // Predicated region
        $region21: #{tpu_custom_call.1} parent=11 // pred_check
          %p185 = pneg %p129
        $region22: #{tpu_custom_call.1} parent=11 // pred_check_branch
          %187 = sbr.rel (%p185) target = $region24
        $region23: #{tpu_custom_call.1} parent=11 // pred_region
          %p188 = scmp.lt.s32.totalorder %s23, 0
          %s189 = scalar_select %p188, %s23, 0
          %s190 = scalar_lea.vmem %s3, %s189
        $region24: #{tpu_custom_call.1} parent=11 // pred_fallthru
          _
      $region12: #{tpu_custom_call.1} parent=5 // pred_fallthru
        _
      %p191 = scmp.lt.s32.totalorder %s13, 2
      // Predicated region
      $region25: #{tpu_custom_call.1} parent=5 // pred_check
        %p192 = pneg %p191
      $region26: #{tpu_custom_call.1} parent=5 // pred_check_branch
        %194 = sbr.rel (%p192) target = $region28
      $region27: #{tpu_custom_call.1} parent=5 // pred_region
        // Predicated region
        $region29: #{tpu_custom_call.1} parent=27 // pred_check
          %p195 = pneg %p45
        $region30: #{tpu_custom_call.1} parent=27 // pred_check_branch
          %197 = sbr.rel (%p195) target = $region32
        $region31: #{tpu_custom_call.1} parent=27 // pred_region
          %s198 = smul.u32 32, %s20
          %p199 = scmp.lt.s32.totalorder %s198, 63
          %s200 = scalar_select %p199, %s198, 63
          %s201 = smul.addr %s200, 4
          %s202 = scalar_lea.vmem %s0, %s201
          %s203 = smul.u32 32, %s20
        $region32: #{tpu_custom_call.1} parent=27 // pred_fallthru
          _
      $region28: #{tpu_custom_call.1} parent=5 // pred_fallthru
        _
      %p204 = scmp.le.s32.totalorder 1, %s13
      %p205 = scmp.lt.s32.totalorder %s13, 3
      %p206 = pnand %p204, %p205
      %p207 = pneg %p206
      // Predicated region
      $region33: #{tpu_custom_call.1} parent=5 // pred_check
        _
      $region34: #{tpu_custom_call.1} parent=5 // pred_check_branch
        %209 = sbr.rel (%p206) target = $region36
      $region35: #{tpu_custom_call.1} parent=5 // pred_region
        %s210 = ssub.s32 %s13, 1
        %s211 = smul.u32 32, %s22
        %p212 = scmp.lt.s32.totalorder %s211, 63
        %s213 = scalar_select %p212, %s211, 63
        %s214 = smul.addr %s213, 4
        %s215 = scalar_lea.vmem %s0, %s214
        %p216 = pneg %p51
        %p217 = pneg %p48
        %p218 = scmp.lt.s32.totalorder %s23, 0
        %s219 = scalar_select %p218, %s23, 0
        %s220 = smul.addr %s219, 4
        %s221 = scalar_lea.vmem %s1, %s220
        %p222 = pneg %p77
        %p223 = pneg %p74
        %p224 = scmp.lt.s32.totalorder %s23, 0
        %s225 = scalar_select %p224, %s23, 0
        %s226 = scalar_lea.vmem %s2, %s225
        %p227 = pneg %p103
        %p228 = pneg %p100
        %p229 = scmp.lt.s32.totalorder %s23, 0
        %s230 = scalar_select %p229, %s23, 0
        %s231 = scalar_lea.vmem %s3, %s230
        %p232 = pneg %p129
        %p233 = pneg %p126
        %p234 = pneg %p157
        %p235 = pneg %p154
        %s236 = sand.u32 %s144, 1
        %s237 = scalar_lea.sflag [#allocation3], %s236
        %s238 = sand.u32 %s144, 1
        %s239 = smul.addr %s238, 128
        %s240 = scalar_lea.vmem [#allocation2], %s239
        %s241 = smul.u32 32, %s22
        %p242 = scmp.lt.s32.totalorder %s241, 63
        %s243 = scalar_select %p242, %s241, 63
        %s244 = smul.addr %s243, 4
        %s245 = scalar_lea.vmem %s0, %s244
        %s246 = smul.u32 32, %s22
        %p247 = scmp.lt.s32.totalorder %s23, 0
        %s248 = scalar_select %p247, %s23, 0
        %s249 = smul.addr %s248, 4
        %s250 = scalar_lea.vmem %s1, %s249
        %p251 = scmp.lt.s32.totalorder %s23, 0
        %s252 = scalar_select %p251, %s23, 0
        %s253 = scalar_lea.vmem %s2, %s252
        %p254 = scmp.lt.s32.totalorder %s23, 0
        %s255 = scalar_select %p254, %s23, 0
        %s256 = scalar_lea.vmem %s3, %s255
        %s257 = smul.u32 32, %s22
        %v259 = vld [vmem:[%s245] sm:$0xf]
        %v260 = vld [vmem:[%s245 + $0x4] sm:$0xf]
        %v261 = vld [vmem:[%s245 + $0x8] sm:$0xf]
        %v262 = vld [vmem:[%s245 + $0xc] sm:$0xf]
        %v263 = vld [vmem:[%s245 + $0x10] sm:$0xf]
        %v264 = vld [vmem:[%s245 + $0x14] sm:$0xf]
        %v265 = vld [vmem:[%s245 + $0x18] sm:$0xf]
        %v266 = vld [vmem:[%s245 + $0x1c] sm:$0xf]
        %v267 = vld [vmem:[%s245 + $0x20] sm:$0xf]
        %v268 = vld [vmem:[%s245 + $0x24] sm:$0xf]
        %v269 = vld [vmem:[%s245 + $0x28] sm:$0xf]
        %v270 = vld [vmem:[%s245 + $0x2c] sm:$0xf]
        %v271 = vld [vmem:[%s245 + $0x30] sm:$0xf]
        %v272 = vld [vmem:[%s245 + $0x34] sm:$0xf]
        %v273 = vld [vmem:[%s245 + $0x38] sm:$0xf]
        %v274 = vld [vmem:[%s245 + $0x3c] sm:$0xf]
        %v275 = vld [vmem:[%s245 + $0x40] sm:$0xf]
        %v276 = vld [vmem:[%s245 + $0x44] sm:$0xf]
        %v277 = vld [vmem:[%s245 + $0x48] sm:$0xf]
        %v278 = vld [vmem:[%s245 + $0x4c] sm:$0xf]
        %v279 = vld [vmem:[%s245 + $0x50] sm:$0xf]
        %v280 = vld [vmem:[%s245 + $0x54] sm:$0xf]
        %v281 = vld [vmem:[%s245 + $0x58] sm:$0xf]
        %v282 = vld [vmem:[%s245 + $0x5c] sm:$0xf]
        %v283 = vld [vmem:[%s245 + $0x60] sm:$0xf]
        %v284 = vld [vmem:[%s245 + $0x64] sm:$0xf]
        %v285 = vld [vmem:[%s245 + $0x68] sm:$0xf]
        %v286 = vld [vmem:[%s245 + $0x6c] sm:$0xf]
        %v287 = vld [vmem:[%s245 + $0x70] sm:$0xf]
        %v288 = vld [vmem:[%s245 + $0x74] sm:$0xf]
        %v289 = vld [vmem:[%s245 + $0x78] sm:$0xf]
        %v290 = vld [vmem:[%s245 + $0x7c] sm:$0xf]
        %v291 = vld [vmem:[%s250] sm:$0xf]
        %v292 = vld [vmem:[%s250 + $0x4] sm:$0x3]
        %v325 = vunpack.c.l.b16 %v259
        %v326 = vunpack.c.l.b16 %v260
        %v327 = vunpack.c.l.b16 %v261
        %v328 = vunpack.c.l.b16 %v262
        %v329 = vunpack.c.l.b16 %v263
        %v330 = vunpack.c.l.b16 %v264
        %v331 = vunpack.c.l.b16 %v265
        %v332 = vunpack.c.l.b16 %v266
        %v333 = vunpack.c.l.b16 %v267
        %v334 = vunpack.c.l.b16 %v268
        %v335 = vunpack.c.l.b16 %v269
        %v336 = vunpack.c.l.b16 %v270
        %v337 = vunpack.c.l.b16 %v271
        %v338 = vunpack.c.l.b16 %v272
        %v339 = vunpack.c.l.b16 %v273
        %v340 = vunpack.c.l.b16 %v274
        %v341 = vunpack.c.l.b16 %v275
        %v342 = vunpack.c.l.b16 %v276
        %v343 = vunpack.c.l.b16 %v277
        %v344 = vunpack.c.l.b16 %v278
        %v345 = vunpack.c.l.b16 %v279
        %v346 = vunpack.c.l.b16 %v280
        %v347 = vunpack.c.l.b16 %v281
        %v348 = vunpack.c.l.b16 %v282
        %v349 = vunpack.c.l.b16 %v283
        %v350 = vunpack.c.l.b16 %v284
        %v351 = vunpack.c.l.b16 %v285
        %v352 = vunpack.c.l.b16 %v286
        %v353 = vunpack.c.l.b16 %v287
        %v354 = vunpack.c.l.b16 %v288
        %v355 = vunpack.c.l.b16 %v289
        %v356 = vunpack.c.l.b16 %v290
        %v357 = vpack.c.b16 %v326, %v325
        %v358 = vpack.c.b16 %v328, %v327
        %v359 = vpack.c.b16 %v330, %v329
        %v360 = vpack.c.b16 %v332, %v331
        %v361 = vpack.c.b16 %v334, %v333
        %v362 = vpack.c.b16 %v336, %v335
        %v363 = vpack.c.b16 %v338, %v337
        %v364 = vpack.c.b16 %v340, %v339
        %v365 = vpack.c.b16 %v342, %v341
        %v366 = vpack.c.b16 %v344, %v343
        %v367 = vpack.c.b16 %v346, %v345
        %v368 = vpack.c.b16 %v348, %v347
        %v369 = vpack.c.b16 %v350, %v349
        %v370 = vpack.c.b16 %v352, %v351
        %v371 = vpack.c.b16 %v354, %v353
        %v372 = vpack.c.b16 %v356, %v355
        %v375 = vunpack.c.l.b16 %v291
        %v376 = vunpack.c.l.b16 %v292
        %v377 = vpack.c.b16 %v376, %v375
        %vm378 = vcmask 97280
        %v380 = vsel %vm378, %v357, 0
        %v383 = vsel %vm378, %v358, 0
        %v386 = vsel %vm378, %v359, 0
        %v389 = vsel %vm378, %v360, 0
        %v392 = vsel %vm378, %v361, 0
        %v395 = vsel %vm378, %v362, 0
        %v398 = vsel %vm378, %v363, 0
        %v401 = vsel %vm378, %v364, 0
        %v404 = vsel %vm378, %v365, 0
        %v407 = vsel %vm378, %v366, 0
        %v410 = vsel %vm378, %v367, 0
        %v413 = vsel %vm378, %v368, 0
        %v416 = vsel %vm378, %v369, 0
        %v419 = vsel %vm378, %v370, 0
        %v422 = vsel %vm378, %v371, 0
        %v425 = vsel %vm378, %v372, 0
        %vm427 = vcmask 1045504
        %v429 = vsel %vm427, %v377, 0
        %431 = vmatprep.subr.bf16.mxu0 0
        %432 = vmatpush1.bf16.msra.mxu0 %v429
        %433 = vmatprep.subr.bf16.mxu0 0
        %434 = vmatpush1.bf16.msra.mxu0 0
        %435 = vmatprep.subr.bf16.mxu0 0
        %436 = vmatpush1.bf16.msra.mxu0 0
        %437 = vmatprep.subr.bf16.mxu0 0
        %438 = vmatpush1.bf16.msra.mxu0 0
        %439 = vmatprep.subr.bf16.mxu0 0
        %440 = vmatpush1.bf16.msra.mxu0 0
        %441 = vmatprep.subr.bf16.mxu0 0
        %442 = vmatpush1.bf16.msra.mxu0 0
        %443 = vmatprep.subr.bf16.mxu0 0
        %444 = vmatpush1.bf16.msra.mxu0 0
        %445 = vmatprep.subr.bf16.mxu0 0
        %446 = vmatpush1.bf16.msra.mxu0 0
        %447 = vmatprep.subr.bf16.mxu0 0
        %448 = vmatpush1.bf16.msra.mxu0 0
        %449 = vmatprep.subr.bf16.mxu0 0
        %450 = vmatpush1.bf16.msra.mxu0 0
        %451 = vmatprep.subr.bf16.mxu0 0
        %452 = vmatpush1.bf16.msra.mxu0 0
        %453 = vmatprep.subr.bf16.mxu0 0
        %454 = vmatpush1.bf16.msra.mxu0 0
        %455 = vmatprep.subr.bf16.mxu0 0
        %456 = vmatpush1.bf16.msra.mxu0 0
        %457 = vmatprep.subr.bf16.mxu0 0
        %458 = vmatpush1.bf16.msra.mxu0 0
        %459 = vmatprep.subr.bf16.mxu0 0
        %460 = vmatpush1.bf16.msra.mxu0 0
        %461 = vmatprep.subr.bf16.mxu0 0
        %462 = vmatpush1.bf16.msra.mxu0 0
        %463 = vmatprep.mubr.bf16.mxu0 0
        %464 = vmatmul.mubr.bf16.gmra.mrb[0].mxu0 %v380
        %v465 = vpop.f32.mrb[0].mxu0
        %v466 = vadd.f32 0.0, %v465
        %v467 = vpop.f32.mrb[0].mxu0
        %v468 = vpop.f32.mrb[0].mxu0
        %v469 = vadd.f32 0.0, %v468
        %v470 = vpop.f32.mrb[0].mxu0
        %471 = vmatprep.mubr.bf16.mxu0 0
        %472 = vmatmul.mubr.bf16.gmra.mrb[0].mxu0 %v383
        %v473 = vpop.f32.mrb[0].mxu0
        %v474 = vadd.f32 0.0, %v473
        %v475 = vpop.f32.mrb[0].mxu0
        %v476 = vpop.f32.mrb[0].mxu0
        %v477 = vadd.f32 0.0, %v476
        %v478 = vpop.f32.mrb[0].mxu0
        %479 = vmatprep.mubr.bf16.mxu0 0
        %480 = vmatmul.mubr.bf16.gmra.mrb[0].mxu0 %v386
        %v481 = vpop.f32.mrb[0].mxu0
        %v482 = vadd.f32 0.0, %v481
        %v483 = vpop.f32.mrb[0].mxu0
        %v484 = vpop.f32.mrb[0].mxu0
        %v485 = vadd.f32 0.0, %v484
        %v486 = vpop.f32.mrb[0].mxu0
        %487 = vmatprep.mubr.bf16.mxu0 0
        %488 = vmatmul.mubr.bf16.gmra.mrb[0].mxu0 %v389
        %v489 = vpop.f32.mrb[0].mxu0
        %v490 = vadd.f32 0.0, %v489
        %v491 = vpop.f32.mrb[0].mxu0
        %v492 = vpop.f32.mrb[0].mxu0
        %v493 = vadd.f32 0.0, %v492
        %v494 = vpop.f32.mrb[0].mxu0
        %495 = vmatprep.mubr.bf16.mxu0 0
        %496 = vmatmul.mubr.bf16.gmra.mrb[0].mxu0 %v392
        %v497 = vpop.f32.mrb[0].mxu0
        %v498 = vadd.f32 0.0, %v497
        %v499 = vpop.f32.mrb[0].mxu0
        %v500 = vpop.f32.mrb[0].mxu0
        %v501 = vadd.f32 0.0, %v500
        %v502 = vpop.f32.mrb[0].mxu0
        %503 = vmatprep.mubr.bf16.mxu0 0
        %504 = vmatmul.mubr.bf16.gmra.mrb[0].mxu0 %v395
        %v505 = vpop.f32.mrb[0].mxu0
        %v506 = vadd.f32 0.0, %v505
        %v507 = vpop.f32.mrb[0].mxu0
        %v508 = vpop.f32.mrb[0].mxu0
        %v509 = vadd.f32 0.0, %v508
        %v510 = vpop.f32.mrb[0].mxu0
        %511 = vmatprep.mubr.bf16.mxu0 0
        %512 = vmatmul.mubr.bf16.gmra.mrb[0].mxu0 %v398
        %v513 = vpop.f32.mrb[0].mxu0
        %v514 = vadd.f32 0.0, %v513
        %v515 = vpop.f32.mrb[0].mxu0
        %v516 = vpop.f32.mrb[0].mxu0
        %v517 = vadd.f32 0.0, %v516
        %v518 = vpop.f32.mrb[0].mxu0
        %519 = vmatprep.mubr.bf16.mxu0 0
        %520 = vmatmul.mubr.bf16.gmra.mrb[0].mxu0 %v401
        %v521 = vpop.f32.mrb[0].mxu0
        %v522 = vadd.f32 0.0, %v521
        %v523 = vpop.f32.mrb[0].mxu0
        %v524 = vpop.f32.mrb[0].mxu0
        %v525 = vadd.f32 0.0, %v524
        %v526 = vpop.f32.mrb[0].mxu0
        %527 = vmatprep.mubr.bf16.mxu0 0
        %528 = vmatmul.mubr.bf16.gmra.mrb[0].mxu0 %v404
        %v529 = vpop.f32.mrb[0].mxu0
        %v530 = vadd.f32 0.0, %v529
        %v531 = vpop.f32.mrb[0].mxu0
        %v532 = vpop.f32.mrb[0].mxu0
        %v533 = vadd.f32 0.0, %v532
        %v534 = vpop.f32.mrb[0].mxu0
        %535 = vmatprep.mubr.bf16.mxu0 0
        %536 = vmatmul.mubr.bf16.gmra.mrb[0].mxu0 %v407
        %v537 = vpop.f32.mrb[0].mxu0
        %v538 = vadd.f32 0.0, %v537
        %v539 = vpop.f32.mrb[0].mxu0
        %v540 = vpop.f32.mrb[0].mxu0
        %v541 = vadd.f32 0.0, %v540
        %v542 = vpop.f32.mrb[0].mxu0
        %543 = vmatprep.mubr.bf16.mxu0 0
        %544 = vmatmul.mubr.bf16.gmra.mrb[0].mxu0 %v410
        %v545 = vpop.f32.mrb[0].mxu0
        %v546 = vadd.f32 0.0, %v545
        %v547 = vpop.f32.mrb[0].mxu0
        %v548 = vpop.f32.mrb[0].mxu0
        %v549 = vadd.f32 0.0, %v548
        %v550 = vpop.f32.mrb[0].mxu0
        %551 = vmatprep.mubr.bf16.mxu0 0
        %552 = vmatmul.mubr.bf16.gmra.mrb[0].mxu0 %v413
        %v553 = vpop.f32.mrb[0].mxu0
        %v554 = vadd.f32 0.0, %v553
        %v555 = vpop.f32.mrb[0].mxu0
        %v556 = vpop.f32.mrb[0].mxu0
        %v557 = vadd.f32 0.0, %v556
        %v558 = vpop.f32.mrb[0].mxu0
        %559 = vmatprep.mubr.bf16.mxu0 0
        %560 = vmatmul.mubr.bf16.gmra.mrb[0].mxu0 %v416
        %v561 = vpop.f32.mrb[0].mxu0
        %v562 = vadd.f32 0.0, %v561
        %v563 = vpop.f32.mrb[0].mxu0
        %v564 = vpop.f32.mrb[0].mxu0
        %v565 = vadd.f32 0.0, %v564
        %v566 = vpop.f32.mrb[0].mxu0
        %567 = vmatprep.mubr.bf16.mxu0 0
        %568 = vmatmul.mubr.bf16.gmra.mrb[0].mxu0 %v419
        %v569 = vpop.f32.mrb[0].mxu0
        %v570 = vadd.f32 0.0, %v569
        %v571 = vpop.f32.mrb[0].mxu0
        %v572 = vpop.f32.mrb[0].mxu0
        %v573 = vadd.f32 0.0, %v572
        %v574 = vpop.f32.mrb[0].mxu0
        %575 = vmatprep.mubr.bf16.mxu0 0
        %576 = vmatmul.mubr.bf16.gmra.mrb[0].mxu0 %v422
        %v577 = vpop.f32.mrb[0].mxu0
        %v578 = vadd.f32 0.0, %v577
        %v579 = vpop.f32.mrb[0].mxu0
        %v580 = vpop.f32.mrb[0].mxu0
        %v581 = vadd.f32 0.0, %v580
        %v582 = vpop.f32.mrb[0].mxu0
        %583 = vmatprep.mubr.bf16.mxu0 0
        %584 = vmatmul.mubr.bf16.gmra.mrb[0].mxu0 %v425
        %v585 = vpop.f32.mrb[0].mxu0
        %v586 = vadd.f32 0.0, %v585
        %v587 = vpop.f32.mrb[0].mxu0
        %v588 = vpop.f32.mrb[0].mxu0
        %v589 = vadd.f32 0.0, %v588
        %v590 = vpop.f32.mrb[0].mxu0
        %591 = vdwg.mxu0
        %v592 = vld [vmem:[%s253] sm:$0x1]
        %v594 = vlaneseq
        %v595 = vshrl.u32 %v594, 7
        %v596 = vsub.s32 0, %v595
        %v597 = vrot.slane %v592, %v596
        %v599 = vmul.f32 %v466, %v597
        %v600 = vmul.f32 %v469, %v597
        %v601 = vmul.f32 %v474, %v597
        %v602 = vmul.f32 %v477, %v597
        %v603 = vmul.f32 %v482, %v597
        %v604 = vmul.f32 %v485, %v597
        %v605 = vmul.f32 %v490, %v597
        %v606 = vmul.f32 %v493, %v597
        %v607 = vmul.f32 %v498, %v597
        %v608 = vmul.f32 %v501, %v597
        %v609 = vmul.f32 %v506, %v597
        %v610 = vmul.f32 %v509, %v597
        %v611 = vmul.f32 %v514, %v597
        %v612 = vmul.f32 %v517, %v597
        %v613 = vmul.f32 %v522, %v597
        %v614 = vmul.f32 %v525, %v597
        %v615 = vmul.f32 %v530, %v597
        %v616 = vmul.f32 %v533, %v597
        %v617 = vmul.f32 %v538, %v597
        %v618 = vmul.f32 %v541, %v597
        %v619 = vmul.f32 %v546, %v597
        %v620 = vmul.f32 %v549, %v597
        %v621 = vmul.f32 %v554, %v597
        %v622 = vmul.f32 %v557, %v597
        %v623 = vmul.f32 %v562, %v597
        %v624 = vmul.f32 %v565, %v597
        %v625 = vmul.f32 %v570, %v597
        %v626 = vmul.f32 %v573, %v597
        %v627 = vmul.f32 %v578, %v597
        %v628 = vmul.f32 %v581, %v597
        %v629 = vmul.f32 %v586, %v597
        %v630 = vmul.f32 %v589, %v597
        %v631 = vld [vmem:[%s256] sm:$0x1]
        %v633 = vlaneseq
        %v634 = vshrl.u32 %v633, 7
        %v635 = vsub.s32 0, %v634
        %v636 = vrot.slane %v631, %v635
        %v638 = vadd.f32 %v599, %v636
        %v639 = vadd.f32 %v600, %v636
        %v640 = vadd.f32 %v601, %v636
        %v641 = vadd.f32 %v602, %v636
        %v642 = vadd.f32 %v603, %v636
        %v643 = vadd.f32 %v604, %v636
        %v644 = vadd.f32 %v605, %v636
        %v645 = vadd.f32 %v606, %v636
        %v646 = vadd.f32 %v607, %v636
        %v647 = vadd.f32 %v608, %v636
        %v648 = vadd.f32 %v609, %v636
        %v649 = vadd.f32 %v610, %v636
        %v650 = vadd.f32 %v611, %v636
        %v651 = vadd.f32 %v612, %v636
        %v652 = vadd.f32 %v613, %v636
        %v653 = vadd.f32 %v614, %v636
        %v654 = vadd.f32 %v615, %v636
        %v655 = vadd.f32 %v616, %v636
        %v656 = vadd.f32 %v617, %v636
        %v657 = vadd.f32 %v618, %v636
        %v658 = vadd.f32 %v619, %v636
        %v659 = vadd.f32 %v620, %v636
        %v660 = vadd.f32 %v621, %v636
        %v661 = vadd.f32 %v622, %v636
        %v662 = vadd.f32 %v623, %v636
        %v663 = vadd.f32 %v624, %v636
        %v664 = vadd.f32 %v625, %v636
        %v665 = vadd.f32 %v626, %v636
        %v666 = vadd.f32 %v627, %v636
        %v667 = vadd.f32 %v628, %v636
        %v668 = vadd.f32 %v629, %v636
        %v669 = vadd.f32 %v630, %v636
        %v670 = vpack.c.bf16 %v639, %v638
        %v671 = vpack.c.bf16 %v641, %v640
        %v672 = vpack.c.bf16 %v643, %v642
        %v673 = vpack.c.bf16 %v645, %v644
        %v674 = vpack.c.bf16 %v647, %v646
        %v675 = vpack.c.bf16 %v649, %v648
        %v676 = vpack.c.bf16 %v651, %v650
        %v677 = vpack.c.bf16 %v653, %v652
        %v678 = vpack.c.bf16 %v655, %v654
        %v679 = vpack.c.bf16 %v657, %v656
        %v680 = vpack.c.bf16 %v659, %v658
        %v681 = vpack.c.bf16 %v661, %v660
        %v682 = vpack.c.bf16 %v663, %v662
        %v683 = vpack.c.bf16 %v665, %v664
        %v684 = vpack.c.bf16 %v667, %v666
        %v685 = vpack.c.bf16 %v669, %v668
        %v702 = vunpack.c.l.b16 %v670
        %v703 = vunpack.c.h.b16 %v670
        %v704 = vunpack.c.l.b16 %v671
        %v705 = vunpack.c.h.b16 %v671
        %v706 = vunpack.c.l.b16 %v672
        %v707 = vunpack.c.h.b16 %v672
        %v708 = vunpack.c.l.b16 %v673
        %v709 = vunpack.c.h.b16 %v673
        %v710 = vunpack.c.l.b16 %v674
        %v711 = vunpack.c.h.b16 %v674
        %v712 = vunpack.c.l.b16 %v675
        %v713 = vunpack.c.h.b16 %v675
        %v714 = vunpack.c.l.b16 %v676
        %v715 = vunpack.c.h.b16 %v676
        %v716 = vunpack.c.l.b16 %v677
        %v717 = vunpack.c.h.b16 %v677
        %v718 = vunpack.c.l.b16 %v678
        %v719 = vunpack.c.h.b16 %v678
        %v720 = vunpack.c.l.b16 %v679
        %v721 = vunpack.c.h.b16 %v679
        %v722 = vunpack.c.l.b16 %v680
        %v723 = vunpack.c.h.b16 %v680
        %v724 = vunpack.c.l.b16 %v681
        %v725 = vunpack.c.h.b16 %v681
        %v726 = vunpack.c.l.b16 %v682
        %v727 = vunpack.c.h.b16 %v682
        %v728 = vunpack.c.l.b16 %v683
        %v729 = vunpack.c.h.b16 %v683
        %v730 = vunpack.c.l.b16 %v684
        %v731 = vunpack.c.h.b16 %v684
        %v732 = vunpack.c.l.b16 %v685
        %v733 = vunpack.c.h.b16 %v685
        %v734 = vpack.c.b16 %v702, %v702
        %v735 = vpack.c.b16 %v703, %v703
        %v736 = vpack.c.b16 %v704, %v704
        %v737 = vpack.c.b16 %v705, %v705
        %v738 = vpack.c.b16 %v706, %v706
        %v739 = vpack.c.b16 %v707, %v707
        %v740 = vpack.c.b16 %v708, %v708
        %v741 = vpack.c.b16 %v709, %v709
        %v742 = vpack.c.b16 %v710, %v710
        %v743 = vpack.c.b16 %v711, %v711
        %v744 = vpack.c.b16 %v712, %v712
        %v745 = vpack.c.b16 %v713, %v713
        %v746 = vpack.c.b16 %v714, %v714
        %v747 = vpack.c.b16 %v715, %v715
        %v748 = vpack.c.b16 %v716, %v716
        %v749 = vpack.c.b16 %v717, %v717
        %v750 = vpack.c.b16 %v718, %v718
        %v751 = vpack.c.b16 %v719, %v719
        %v752 = vpack.c.b16 %v720, %v720
        %v753 = vpack.c.b16 %v721, %v721
        %v754 = vpack.c.b16 %v722, %v722
        %v755 = vpack.c.b16 %v723, %v723
        %v756 = vpack.c.b16 %v724, %v724
        %v757 = vpack.c.b16 %v725, %v725
        %v758 = vpack.c.b16 %v726, %v726
        %v759 = vpack.c.b16 %v727, %v727
        %v760 = vpack.c.b16 %v728, %v728
        %v761 = vpack.c.b16 %v729, %v729
        %v762 = vpack.c.b16 %v730, %v730
        %v763 = vpack.c.b16 %v731, %v731
        %v764 = vpack.c.b16 %v732, %v732
        %v765 = vpack.c.b16 %v733, %v733
        %798 = vst [vmem:[%s240] sm:$0xf] %v734
        %799 = vst [vmem:[%s240 + $0x4] sm:$0xf] %v735
        %800 = vst [vmem:[%s240 + $0x8] sm:$0xf] %v736
        %801 = vst [vmem:[%s240 + $0xc] sm:$0xf] %v737
        %802 = vst [vmem:[%s240 + $0x10] sm:$0xf] %v738
        %803 = vst [vmem:[%s240 + $0x14] sm:$0xf] %v739
        %804 = vst [vmem:[%s240 + $0x18] sm:$0xf] %v740
        %805 = vst [vmem:[%s240 + $0x1c] sm:$0xf] %v741
        %806 = vst [vmem:[%s240 + $0x20] sm:$0xf] %v742
        %807 = vst [vmem:[%s240 + $0x24] sm:$0xf] %v743
        %808 = vst [vmem:[%s240 + $0x28] sm:$0xf] %v744
        %809 = vst [vmem:[%s240 + $0x2c] sm:$0xf] %v745
        %810 = vst [vmem:[%s240 + $0x30] sm:$0xf] %v746
        %811 = vst [vmem:[%s240 + $0x34] sm:$0xf] %v747
        %812 = vst [vmem:[%s240 + $0x38] sm:$0xf] %v748
        %813 = vst [vmem:[%s240 + $0x3c] sm:$0xf] %v749
        %814 = vst [vmem:[%s240 + $0x40] sm:$0xf] %v750
        %815 = vst [vmem:[%s240 + $0x44] sm:$0xf] %v751
        %816 = vst [vmem:[%s240 + $0x48] sm:$0xf] %v752
        %817 = vst [vmem:[%s240 + $0x4c] sm:$0xf] %v753
        %818 = vst [vmem:[%s240 + $0x50] sm:$0xf] %v754
        %819 = vst [vmem:[%s240 + $0x54] sm:$0xf] %v755
        %820 = vst [vmem:[%s240 + $0x58] sm:$0xf] %v756
        %821 = vst [vmem:[%s240 + $0x5c] sm:$0xf] %v757
        %822 = vst [vmem:[%s240 + $0x60] sm:$0xf] %v758
        %823 = vst [vmem:[%s240 + $0x64] sm:$0xf] %v759
        %824 = vst [vmem:[%s240 + $0x68] sm:$0xf] %v760
        %825 = vst [vmem:[%s240 + $0x6c] sm:$0xf] %v761
        %826 = vst [vmem:[%s240 + $0x70] sm:$0xf] %v762
        %827 = vst [vmem:[%s240 + $0x74] sm:$0xf] %v763
        %828 = vst [vmem:[%s240 + $0x78] sm:$0xf] %v764
        %829 = vst [vmem:[%s240 + $0x7c] sm:$0xf] %v765
        %s830 = sand.u32 %s144, 1
        %s831 = scalar_lea.sflag [#allocation3], %s830
        %s832 = sand.u32 %s144, 1
        %s833 = smul.addr %s832, 128
        %s834 = scalar_lea.vmem [#allocation2], %s833
        // Predicated region
        $region37: #{tpu_custom_call.1} parent=35 // pred_check
          %p835 = pneg %p154
        $region38: #{tpu_custom_call.1} parent=35 // pred_check_branch
          %837 = sbr.rel (%p835) target = $region40
        $region39: #{tpu_custom_call.1} parent=35 // pred_region
          %s838 = smul.u32 32, %s22
          %s840 = ssub.s32 2048, 2048
          %841 = vsyncadd %s831, %s840
          %s842 = sadd.s32 %s23, %s838
          %s843 = smul.addr %s842, 64
          %s844 = scalar_lea.hbm %s4, %s843
          %s845 = sshll.u32 %s834, 4
          %s846 = int_to_ptr.vmem [resolvable:$true] %s845
          %851 = dma.vmem_to_hbm [thread:$0]  %s846, 2048, %s844, %s831, 64, 64, 4
        $region40: #{tpu_custom_call.1} parent=35 // pred_fallthru
          _
      $region36: #{tpu_custom_call.1} parent=5 // pred_fallthru
        _
      %p852 = scmp.le.s32.totalorder 2, %s13
      // Predicated region
      $region41: #{tpu_custom_call.1} parent=5 // pred_check
        %p853 = pneg %p852
      $region42: #{tpu_custom_call.1} parent=5 // pred_check_branch
        %855 = sbr.rel (%p853) target = $region44
      $region43: #{tpu_custom_call.1} parent=5 // pred_region
        %s856 = ssub.s32 %s13, 2
        // Predicated region
        $region45: #{tpu_custom_call.1} parent=43 // pred_check
          %p857 = pneg %p160
        $region46: #{tpu_custom_call.1} parent=43 // pred_check_branch
          %859 = sbr.rel (%p857) target = $region48
        $region47: #{tpu_custom_call.1} parent=43 // pred_region
          %s860 = sand.u32 %s145, 1
          %s861 = scalar_lea.sflag [#allocation3], %s860
          %s862 = sand.u32 %s145, 1
          %s863 = smul.addr %s862, 128
          %s864 = scalar_lea.vmem [#allocation2], %s863
          %865 = dma.done %s861, 2048
        $region48: #{tpu_custom_call.1} parent=43 // pred_fallthru
          _
      $region44: #{tpu_custom_call.1} parent=5 // pred_fallthru
        _
    $region6: #{tpu_custom_call.1} parent=1 // loop_footer
      %s17 = sadd.s32 1, %s13
    $region7: #{tpu_custom_call.1} parent=1 // loop_footer_branch
      %12 = sbr.rel target = $region3
    $region8: #{tpu_custom_call.1} parent=1 // loop_exit
      _
    %866 = vsyncpa [#allocation3], 1
    %s867 = scalar_lea.sflag [#allocation3], 1
    %868 = vsyncpa %s867, 1

</llo_original>
